<compile_context>
chip_gen: v7x
topology: tpu7x:2x2x1
jax: 0.10.0
libtpu: 0.0.40
codegen_flags: <defaults>
</compile_context>

<pallas_src>
import jax
import jax.numpy as jnp
from jax.experimental import pallas as pl
from jax.experimental.pallas import tpu as pltpu


# ---------------------------------------------------------------------------
# Kernel: local branch (native NCHW, HW on lanes) + fused (bias2 + global xg)
# add + tanh-form sigmoid.
# ---------------------------------------------------------------------------
def _ms_cam_kernel(x_ref, w1t_ref, b1_ref, w2t_ref, add2_ref, o_ref):
    """One (batch, spatial-tile) block.

    x_ref    : (C_in, TILE)   f32   input activations (cast to bf16 in-kernel)
    w1t_ref  : (inter, C_in)  bf16  folded Conv1x1_1 + BN1 weight (transposed)
    b1_ref   : (inter, 1)     f32   folded Conv1x1_1 + BN1 bias
    w2t_ref  : (C_out, inter) bf16  folded Conv1x1_2 + BN2 weight (transposed)
    add2_ref : (C_out, 1)     f32   per-batch (folded conv2 bias + global xg)
    o_ref    : (C_out, TILE)  bf16
    """
    x = x_ref[...].astype(jnp.bfloat16)                            # (C_in, TILE)
    h = jnp.dot(w1t_ref[...], x,
                preferred_element_type=jnp.float32) + b1_ref[...]  # (inter, TILE)
    h = jnp.maximum(h, 0.0)                                        # ReLU (VPU)
    y = jnp.dot(w2t_ref[...], h.astype(jnp.bfloat16),
                preferred_element_type=jnp.float32)                # (C_out, TILE)
    z = y + add2_ref[...]                                          # broadcast xg+b2
    # sigmoid(z) = 0.5*tanh(0.5*z) + 0.5  -> single EUP transcendental/element
    o_ref[...] = (0.5 * jnp.tanh(0.5 * z) + 0.5).astype(jnp.bfloat16)


# ---------------------------------------------------------------------------
# Tiling heuristics
# ---------------------------------------------------------------------------
def _choose_tile(hw, n_batch, *, min_steps=4, max_tile=2048):
    """Lane tile along HW.

    Prefers a multiple-of-128 divisor of hw (unmasked, lane-dense stores),
    as large as possible up to `max_tile` (v7x VMEM-safe), then shrinks until
    n_batch * n_tiles >= min_steps so both v7x TensorCores get work and the
    DMA/compute pipeline can double-buffer.
    """
    if hw % 128 != 0:
        # Fall back to one full-extent spatial block (still correct; stores may
        # be lane-masked for odd spatial sizes).
        return hw
    tile = 128
    for cand in range(max_tile, 127, -128):
        if hw % cand == 0:
            tile = cand
            break
    while tile > 128 and n_batch * (hw // tile) < min_steps:
        smaller = None
        for cand in range(tile - 128, 127, -128):
            if hw % cand == 0:
                smaller = cand
                break
        if smaller is None:
            break
        tile = smaller
    return tile


# ---------------------------------------------------------------------------
# Wrapper
# ---------------------------------------------------------------------------
def ms_cam_pallas(x_nchw, params):
    """x_nchw: (N, C_in, H, W) float32. params: dict of BN-folded weights/biases.

    Returns the sigmoid attention gate in NCHW layout, dtype bfloat16.
    """
    N, C_in, H, W = x_nchw.shape
    HW = H * W
    inter = params["lw1"].shape[1]
    C_out = params["lw2"].shape[1]

    # Free reshape (no transpose): NCHW -> (N, C_in, HW), HW on the lane axis.
    x_flat = x_nchw.reshape(N, C_in, HW)

    # ---- global branch hoisted out of the kernel (one "pixel" per image),
    #      folded with the local conv2 bias into one per-batch additive vector.
    gmean = jnp.mean(x_nchw, axis=(2, 3))                              # (N, C_in)
    gh = jnp.maximum(gmean @ params["gw1"] + params["gb1"], 0.0)       # (N, inter)
    xg = gh @ params["gw2"] + params["gb2"]                            # (N, C_out)
    add2 = (xg + params["lb2"])[:, :, None]                            # (N, C_out, 1)

    # ---- tiny local-branch weights, transposed for the NCHW formulation.
    w1t = params["lw1"].T.astype(jnp.bfloat16)                         # (inter, C_in)
    w2t = params["lw2"].T.astype(jnp.bfloat16)                         # (C_out, inter)
    b1 = params["lb1"].reshape(inter, 1)                               # (inter, 1) f32

    TILE = _choose_tile(HW, N)
    n_tiles = HW // TILE

    # VMEM budget derived from actual buffer sizes (double-buffered I/O tiles
    # + resident weights + headroom for f32 intermediates), capped for v7x.
    x_tile_b = C_in * TILE * 4
    o_tile_b = C_out * TILE * 2
    w_b = (inter * C_in + C_out * inter) * 2 + (inter + N * C_out) * 4
    interm_b = (inter + 2 * C_out) * TILE * 4
    vmem_limit = int(min(max(2 * (x_tile_b + o_tile_b) + w_b + 2 * interm_b
                             + (4 << 20), 16 << 20), 48 << 20))

    cost = pl.CostEstimate(
        flops=2 * N * HW * (C_in * inter + inter * C_out),
        transcendentals=N * HW * C_out,                                # one tanh/elem
        bytes_accessed=N * HW * (C_in * 4 + C_out * 2)
        + (inter * C_in + C_out * inter) * 2 + (inter + N * C_out) * 4,
    )

    const_map = lambda n, t: (0, 0)  # resident weight/bias blocks

    out = pl.pallas_call(
        _ms_cam_kernel,
        out_shape=jax.ShapeDtypeStruct((N, C_out, HW), jnp.bfloat16),
        grid_spec=pltpu.PrefetchScalarGridSpec(
            num_scalar_prefetch=0,
            grid=(N, n_tiles),
            in_specs=[
                pl.BlockSpec((pl.Squeezed(), C_in, TILE),
                             lambda n, t: (n, 0, t)),                  # x tile
                pl.BlockSpec((inter, C_in), const_map),                # W1^T
                pl.BlockSpec((inter, 1), const_map),                   # b1
                pl.BlockSpec((C_out, inter), const_map),               # W2^T
                pl.BlockSpec((pl.Squeezed(), C_out, 1),
                             lambda n, t: (n, 0, 0)),                  # bias2 + xg
            ],
            out_specs=pl.BlockSpec((pl.Squeezed(), C_out, TILE),
                                   lambda n, t: (n, 0, t)),
        ),
        compiler_params=pltpu.CompilerParams(
            dimension_semantics=("parallel", "parallel"),
            vmem_limit_bytes=vmem_limit,
        ),
        cost_estimate=cost,
    )(x_flat, w1t, b1, w2t, add2)

    # Free reshape back to NCHW (no transpose). Output stays bf16 (gate values
    # in (0,1) tolerate bf16; keeps HBM store traffic halved).
    return out.reshape(N, C_out, H, W)


# ---------------------------------------------------------------------------
# Deterministic parameter construction (Conv2d 1x1 + BatchNorm2d, eval mode),
# conv-bias + BN folded into (weight-column scale, additive bias).
# Weights stored as (in, out) so branch math is x @ W.
# ---------------------------------------------------------------------------
def _make_branch_params(key, c_in, inter, c_out, eps=1e-5):
    ks = jax.random.split(key, 10)
    w1 = jax.random.normal(ks[0], (c_in, inter), jnp.float32) * 0.1
    b1 = jax.random.normal(ks[1], (inter,), jnp.float32) * 0.1
    w2 = jax.random.normal(ks[2], (inter, c_out), jnp.float32) * 0.1
    b2 = jax.random.normal(ks[3], (c_out,), jnp.float32) * 0.1
    g1 = jax.random.uniform(ks[4], (inter,), jnp.float32, 0.5, 1.5)
    beta1 = jax.random.normal(ks[5], (inter,), jnp.float32) * 0.1
    mu1 = jax.random.normal(ks[6], (inter,), jnp.float32) * 0.1
    var1 = jax.random.uniform(ks[7], (inter,), jnp.float32, 0.5, 1.5)
    g2 = jax.random.uniform(ks[8], (c_out,), jnp.float32, 0.5, 1.5)
    beta2 = jax.random.normal(ks[9], (c_out,), jnp.float32) * 0.1
    mu2 = jnp.zeros((c_out,), jnp.float32)
    var2 = jnp.ones((c_out,), jnp.float32)

    s1 = g1 / jnp.sqrt(var1 + eps)
    s2 = g2 / jnp.sqrt(var2 + eps)
    w1_eff = w1 * s1[None, :]
    b1_eff = (b1 - mu1) * s1 + beta1
    w2_eff = w2 * s2[None, :]
    b2_eff = (b2 - mu2) * s2 + beta2
    return w1_eff, b1_eff, w2_eff, b2_eff


def _reference(x_nchw, p):
    """Pure-JAX f32 reference mirroring the PyTorch forward (eval-mode BN folded)."""
    N, C, H, W = x_nchw.shape
    xf = jnp.transpose(x_nchw, (0, 2, 3, 1)).reshape(N, H * W, C)

    def branch(inp, w1, b1, w2, b2):
        h = jnp.maximum(inp @ w1 + b1, 0.0)
        return h @ w2 + b2

    xl = branch(xf, p["lw1"], p["lb1"], p["lw2"], p["lb2"])            # (N, HW, Cout)
    gmean = jnp.mean(xf, axis=1, keepdims=True)                        # (N, 1, Cin)
    xg = branch(gmean, p["gw1"], p["gb1"], p["gw2"], p["gb2"])         # (N, 1, Cout)
    out = jax.nn.sigmoid(xl + xg)
    Cout = out.shape[-1]
    return jnp.transpose(out.reshape(N, H, W, Cout), (0, 3, 1, 2))


if __name__ == "__main__":
    # Representative small shapes: input_channel=output_channel=64, r=4 -> inter=16
    # TODO(synk): training-mode BatchNorm (batch-stat updates) is not modeled;
    # eval-mode running stats are folded into the conv weights/biases.
    N, C_in, C_out, r = 2, 64, 64, 4
    H = W = 16
    inter = C_in // r

    key = jax.random.PRNGKey(0)
    kx, kl, kg = jax.random.split(key, 3)

    x = jax.random.normal(kx, (N, C_in, H, W), jnp.float32)

    lw1, lb1, lw2, lb2 = _make_branch_params(kl, C_in, inter, C_out)
    gw1, gb1, gw2, gb2 = _make_branch_params(kg, C_in, inter, C_out)
    params = dict(lw1=lw1, lb1=lb1, lw2=lw2, lb2=lb2,
                  gw1=gw1, gb1=gb1, gw2=gw2, gb2=gb2)

    out = jax.block_until_ready(ms_cam_pallas(x, params))
    ref = jax.block_until_ready(_reference(x, params))

    assert out.shape == (N, C_out, H, W)
    # bf16 activations/weights + bf16 output gate -> loosened tolerance vs f32 ref.
    max_err = float(jnp.max(jnp.abs(out.astype(jnp.float32) - ref)))
    assert max_err < 2e-2, f"mismatch vs reference (max abs err {max_err})"
    print("KERNEL_OK")
</pallas_src>

<mosaic_0001>
module attributes {stable_mosaic.version = 11 : i64} {
  func.func @_ms_cam_kernel(%arg0: i32, %arg1: i32, %arg2: memref<1x64x128xf32, #tpu.memory_space<vmem>>, %arg3: memref<16x64xbf16, #tpu.memory_space<vmem>>, %arg4: memref<16x1xf32, #tpu.memory_space<vmem>>, %arg5: memref<64x16xbf16, #tpu.memory_space<vmem>>, %arg6: memref<1x64x1xf32, #tpu.memory_space<vmem>>, %arg7: memref<1x64x128xbf16, #tpu.memory_space<vmem>>) attributes {dimension_semantics = [#tpu.dimension_semantics<parallel>, #tpu.dimension_semantics<parallel>], iteration_bounds = array<i64: 2, 2>, scalar_prefetch = 0 : i64, scratch_operands = 0 : i64, tpu.core_type = #tpu.core_type<tc>, window_params = [{transform_indices = @transform_0, window_bounds = array<i64: 1, 64, 128>}, {pipeline_mode = #tpu.pipeline_mode<synchronous>, transform_indices = @transform_1, window_bounds = array<i64: 16, 64>}, {pipeline_mode = #tpu.pipeline_mode<synchronous>, transform_indices = @transform_2, window_bounds = array<i64: 16, 1>}, {pipeline_mode = #tpu.pipeline_mode<synchronous>, transform_indices = @transform_3, window_bounds = array<i64: 64, 16>}, {transform_indices = @transform_4, window_bounds = array<i64: 1, 64, 1>}, {transform_indices = @transform_5, window_bounds = array<i64: 1, 64, 128>}]} {
    %c0 = arith.constant 0 : index
    %c0_0 = arith.constant 0 : index
    %c0_1 = arith.constant 0 : index
    %0 = vector.load %arg2[%c0, %c0_0, %c0_1] : memref<1x64x128xf32, #tpu.memory_space<vmem>>, vector<1x64x128xf32>
    %1 = vector.shape_cast %0 : vector<1x64x128xf32> to vector<64x128xf32>
    %2 = arith.truncf %1 : vector<64x128xf32> to vector<64x128xbf16>
    %c0_2 = arith.constant 0 : index
    %c0_3 = arith.constant 0 : index
    %3 = vector.load %arg3[%c0_2, %c0_3] : memref<16x64xbf16, #tpu.memory_space<vmem>>, vector<16x64xbf16>
    %cst = arith.constant dense<0.000000e+00> : vector<16x128xf32>
    %4 = tpu.matmul %3, %2, %cst {dimension_numbers = #tpu.dot_dimension_numbers<[1], [0], [0], [1], [0, 0, 1, 1], [], []>} : vector<16x64xbf16>, vector<64x128xbf16>, vector<16x128xf32> -> vector<16x128xf32>
    %c0_4 = arith.constant 0 : index
    %c0_5 = arith.constant 0 : index
    %5 = vector.load %arg4[%c0_4, %c0_5] : memref<16x1xf32, #tpu.memory_space<vmem>>, vector<16x1xf32>
    %6 = vector.broadcast %5 : vector<16x1xf32> to vector<16x128xf32>
    %7 = arith.addf %4, %6 : vector<16x128xf32>
    %cst_6 = arith.constant 0.000000e+00 : f32
    %8 = vector.broadcast %cst_6 : f32 to vector<16x128xf32>
    %9 = arith.maximumf %7, %8 : vector<16x128xf32>
    %c0_7 = arith.constant 0 : index
    %c0_8 = arith.constant 0 : index
    %10 = vector.load %arg5[%c0_7, %c0_8] : memref<64x16xbf16, #tpu.memory_space<vmem>>, vector<64x16xbf16>
    %11 = arith.truncf %9 : vector<16x128xf32> to vector<16x128xbf16>
    %cst_9 = arith.constant dense<0.000000e+00> : vector<64x128xf32>
    %12 = tpu.matmul %10, %11, %cst_9 {dimension_numbers = #tpu.dot_dimension_numbers<[1], [0], [0], [1], [0, 0, 1, 1], [], []>} : vector<64x16xbf16>, vector<16x128xbf16>, vector<64x128xf32> -> vector<64x128xf32>
    %c0_10 = arith.constant 0 : index
    %c0_11 = arith.constant 0 : index
    %c0_12 = arith.constant 0 : index
    %13 = vector.load %arg6[%c0_10, %c0_11, %c0_12] : memref<1x64x1xf32, #tpu.memory_space<vmem>>, vector<1x64x1xf32>
    %14 = vector.shape_cast %13 : vector<1x64x1xf32> to vector<64x1xf32>
    %15 = vector.broadcast %14 : vector<64x1xf32> to vector<64x128xf32>
    %16 = arith.addf %12, %15 : vector<64x128xf32>
    %cst_13 = arith.constant 5.000000e-01 : f32
    %17 = vector.broadcast %cst_13 : f32 to vector<64x128xf32>
    %18 = arith.mulf %17, %16 : vector<64x128xf32>
    %19 = math.tanh %18 : vector<64x128xf32>
    %cst_14 = arith.constant 5.000000e-01 : f32
    %20 = vector.broadcast %cst_14 : f32 to vector<64x128xf32>
    %21 = arith.mulf %20, %19 : vector<64x128xf32>
    %cst_15 = arith.constant 5.000000e-01 : f32
    %22 = vector.broadcast %cst_15 : f32 to vector<64x128xf32>
    %23 = arith.addf %21, %22 : vector<64x128xf32>
    %24 = arith.truncf %23 : vector<64x128xf32> to vector<64x128xbf16>
    %c0_16 = arith.constant 0 : index
    %c0_17 = arith.constant 0 : index
    %c0_18 = arith.constant 0 : index
    %25 = vector.load %arg7[%c0_16, %c0_17, %c0_18] : memref<1x64x128xbf16, #tpu.memory_space<vmem>>, vector<1x64x128xbf16>
    %26 = vector.shape_cast %25 : vector<1x64x128xbf16> to vector<64x128xbf16>
    %27 = vector.shape_cast %24 : vector<64x128xbf16> to vector<1x64x128xbf16>
    tpu.vector_store %arg7[%c0_16, %c0_17, %c0_18], %27 {strides = array<i32>} : memref<1x64x128xbf16, #tpu.memory_space<vmem>>, vector<1x64x128xbf16>,
    return
  }
  func.func @transform_0(%arg0: i32, %arg1: i32) -> (i32, i32, i32) {
    %c0_i32 = arith.constant 0 : i32
    %c0_i32_0 = arith.constant 0 : i32
    return %arg0, %c0_i32, %arg1 : i32, i32, i32
  }
  func.func @transform_1(%arg0: i32, %arg1: i32) -> (i32, i32) {
    %c0_i32 = arith.constant 0 : i32
    %c0_i32_0 = arith.constant 0 : i32
    %c0_i32_1 = arith.constant 0 : i32
    return %c0_i32, %c0_i32_0 : i32, i32
  }
  func.func @transform_2(%arg0: i32, %arg1: i32) -> (i32, i32) {
    %c0_i32 = arith.constant 0 : i32
    %c0_i32_0 = arith.constant 0 : i32
    %c0_i32_1 = arith.constant 0 : i32
    return %c0_i32, %c0_i32_0 : i32, i32
  }
  func.func @transform_3(%arg0: i32, %arg1: i32) -> (i32, i32) {
    %c0_i32 = arith.constant 0 : i32
    %c0_i32_0 = arith.constant 0 : i32
    %c0_i32_1 = arith.constant 0 : i32
    return %c0_i32, %c0_i32_0 : i32, i32
  }
  func.func @transform_4(%arg0: i32, %arg1: i32) -> (i32, i32, i32) {
    %c0_i32 = arith.constant 0 : i32
    %c0_i32_0 = arith.constant 0 : i32
    %c0_i32_1 = arith.constant 0 : i32
    return %arg0, %c0_i32, %c0_i32_0 : i32, i32, i32
  }
  func.func @transform_5(%arg0: i32, %arg1: i32) -> (i32, i32, i32) {
    %c0_i32 = arith.constant 0 : i32
    %c0_i32_0 = arith.constant 0 : i32
    return %arg0, %c0_i32, %arg1 : i32, i32, i32
  }
}

</mosaic_0001>

<llo_original>
// kernel: tpu_custom_call.1
$region0: #{tpu_custom_call.1}
  #allocation0 [shape = 'u32[]', space=smem, size = 0x4, offset = 0x4, fixed_abs, tag = 'smem constant byte address 0x4 - core index']
  #allocation1 [shape = 'u32[144,128]{1,0:T(1,128)}', space=vmem, size = 0x12000, scoped, tag = 'internal scratch']
  %s0 = inlined_call_operand.hbm [shape: f32[2,64,256], index: 0, kind: input, shape index: {}]
  %s1 = inlined_call_operand.vmem [shape: bf16[16,64], index: 1, kind: input, shape index: {}]
  %s2 = inlined_call_operand.vmem [shape: f32[16,1], index: 2, kind: input, shape index: {}]
  %s3 = inlined_call_operand.vmem [shape: bf16[64,16], index: 3, kind: input, shape index: {}]
  %s4 = inlined_call_operand.vmem [shape: f32[2,64,1], index: 4, kind: input, shape index: {}]
  %s5 = inlined_call_operand.hbm [shape: bf16[2,64,256], index: 5, kind: output, shape index: {}]
  %s6 = sld [smem:[#allocation0]]
  $region57: #{tpu_custom_call.1} parent=0
    _
  %s8 = ssub.s32 1, %s6
  %s9 = scalar_select 0, %s8, %s6
  $region1: #{tpu_custom_call.1} parent=0
    #allocation2 [shape = 'u8[65536]{0}', space=vmem, size = 0x10000, scoped, tag = 'input window, operand 0']
    #allocation3 [shape = 's32[2]{0}', space=sflag, size = 0x8, scoped, tag = 'scoped memory for tpu_custom_call.1']
    #allocation4 [shape = 's32[2]{0}', space=sflag, size = 0x8, scoped, tag = 'scoped memory for tpu_custom_call.1']
    #allocation5 [shape = 'u8[32768]{0}', space=vmem, size = 0x8000, scoped, tag = 'output window, operand 0']
    %10 = vsyncpa [#allocation3], 0
    %s11 = scalar_lea.sflag [#allocation3], 1
    %12 = vsyncpa %s11, 0
    %13 = vsyncpa [#allocation4], 0
    %s14 = scalar_lea.sflag [#allocation4], 1
    %15 = vsyncpa %s14, 0
    loop: start=0, step=1, limit=6
    $region2: #{tpu_custom_call.1} parent=1 // loop_pre_header
      _
    $region3: #{tpu_custom_call.1} parent=1 // loop_header
      %s17 = sphi 0, %s21
      %p18 = scmp.ge.s32.totalorder %s17, 6
      %s24 = sphi 0, %s36
      %s25 = sphi 0, %s32
      %s26 = sphi 0, %s24
      %s27 = sphi 0, %s25
      %s28 = sphi 0, %s26
      %s29 = sphi 0, %s27
      %s41 = sphi 0, %s43
      %s44 = sphi 0, %s41
      %s45 = sphi 0, %s44
      %s61 = sphi 0, %s45
      %s65 = sphi 0, %s65
      %s67 = sphi 0, %s65
      %s68 = sphi 0, %s67
      %s82 = sphi 0, %s68
      %s86 = sphi 0, %s86
      %s88 = sphi 0, %s86
      %s89 = sphi 0, %s88
      %s103 = sphi 0, %s89
      %s107 = sphi 0, %s107
      %s109 = sphi 0, %s107
      %s110 = sphi 0, %s109
      %s124 = sphi 0, %s110
      %s130 = sphi 0, %s132
      %s133 = sphi 0, %s130
      %s134 = sphi 0, %s133
      %s150 = sphi 0, %s134
      %s158 = sphi 0, %s160
      %s161 = sphi 0, %s158
      %s162 = sphi 0, %s161
      %s178 = sphi 0, %s162
    $region4: #{tpu_custom_call.1} parent=1 // loop_header_branch
      %20 = sbr.rel (%p18) target = $region8
    $region5: #{tpu_custom_call.1} parent=1 // loop_body
      %s22 = ssub.s32 %s17, 1
      %s23 = ssub.s32 %s17, 2
      %s30 = sadd.s32 1, %s25
      %p31 = scmp.ge.s32.totalorder %s30, 2
      %s32 = scalar_select %p31, 0, %s30
      %s33 = sadd.s32 1, %s24
      %s34 = scalar_select %p31, %s33, %s24
      %p35 = scmp.ge.s32.totalorder %s34, 2
      %s36 = scalar_select %p35, 0, %s34
      %s37 = ssub.s32 %s24, %s36
      %s38 = ssub.s32 %s25, %s32
      %s39 = sor.u32 %s37, %s38
      %p40 = scmp.eq.s32.totalorder %s39, 0
      %s42 = sadd.s32 %s41, 1
      %s43 = scalar_select %p40, %s41, %s42
      %p46 = pneg %p40
      %p47 = scmp.eq.s32.totalorder %s17, 3
      %p48 = por %p46, %p47
      %p49 = scmp.ne.s32.totalorder %s41, %s44
      %p50 = scmp.eq.s32.totalorder %s17, 0
      %p51 = por %p49, %p50
      %p52 = scmp.ne.s32.totalorder %s41, %s44
      %p53 = scmp.eq.s32.totalorder %s22, 3
      %p54 = por %p52, %p53
      %p55 = scmp.ne.s32.totalorder %s44, %s45
      %p56 = scmp.eq.s32.totalorder %s22, 0
      %p57 = por %p55, %p56
      %p58 = scmp.ne.s32.totalorder %s44, %s45
      %p59 = scmp.eq.s32.totalorder %s23, 3
      %p60 = por %p58, %p59
      %p62 = scmp.ne.s32.totalorder %s45, %s61
      %p63 = scmp.eq.s32.totalorder %s23, 0
      %p64 = por %p62, %p63
      %s66 = sadd.s32 %s65, 1
      %p69 = scmp.eq.s32.totalorder %s17, 3
      %p70 = scmp.ne.s32.totalorder %s65, %s67
      %p71 = scmp.eq.s32.totalorder %s17, 0
      %p72 = por %p70, %p71
      %p73 = scmp.ne.s32.totalorder %s65, %s67
      %p74 = scmp.eq.s32.totalorder %s22, 3
      %p75 = por %p73, %p74
      %p76 = scmp.ne.s32.totalorder %s67, %s68
      %p77 = scmp.eq.s32.totalorder %s22, 0
      %p78 = por %p76, %p77
      %p79 = scmp.ne.s32.totalorder %s67, %s68
      %p80 = scmp.eq.s32.totalorder %s23, 3
      %p81 = por %p79, %p80
      %p83 = scmp.ne.s32.totalorder %s68, %s82
      %p84 = scmp.eq.s32.totalorder %s23, 0
      %p85 = por %p83, %p84
      %s87 = sadd.s32 %s86, 1
      %p90 = scmp.eq.s32.totalorder %s17, 3
      %p91 = scmp.ne.s32.totalorder %s86, %s88
      %p92 = scmp.eq.s32.totalorder %s17, 0
      %p93 = por %p91, %p92
      %p94 = scmp.ne.s32.totalorder %s86, %s88
      %p95 = scmp.eq.s32.totalorder %s22, 3
      %p96 = por %p94, %p95
      %p97 = scmp.ne.s32.totalorder %s88, %s89
      %p98 = scmp.eq.s32.totalorder %s22, 0
      %p99 = por %p97, %p98
      %p100 = scmp.ne.s32.totalorder %s88, %s89
      %p101 = scmp.eq.s32.totalorder %s23, 3
      %p102 = por %p100, %p101
      %p104 = scmp.ne.s32.totalorder %s89, %s103
      %p105 = scmp.eq.s32.totalorder %s23, 0
      %p106 = por %p104, %p105
      %s108 = sadd.s32 %s107, 1
      %p111 = scmp.eq.s32.totalorder %s17, 3
      %p112 = scmp.ne.s32.totalorder %s107, %s109
      %p113 = scmp.eq.s32.totalorder %s17, 0
      %p114 = por %p112, %p113
      %p115 = scmp.ne.s32.totalorder %s107, %s109
      %p116 = scmp.eq.s32.totalorder %s22, 3
      %p117 = por %p115, %p116
      %p118 = scmp.ne.s32.totalorder %s109, %s110
      %p119 = scmp.eq.s32.totalorder %s22, 0
      %p120 = por %p118, %p119
      %p121 = scmp.ne.s32.totalorder %s109, %s110
      %p122 = scmp.eq.s32.totalorder %s23, 3
      %p123 = por %p121, %p122
      %p125 = scmp.ne.s32.totalorder %s110, %s124
      %p126 = scmp.eq.s32.totalorder %s23, 0
      %p127 = por %p125, %p126
      %s128 = ssub.s32 %s24, %s36
      %p129 = scmp.eq.s32.totalorder %s128, 0
      %s131 = sadd.s32 %s130, 1
      %s132 = scalar_select %p129, %s130, %s131
      %p135 = pneg %p129
      %p136 = scmp.eq.s32.totalorder %s17, 3
      %p137 = por %p135, %p136
      %p138 = scmp.ne.s32.totalorder %s130, %s133
      %p139 = scmp.eq.s32.totalorder %s17, 0
      %p140 = por %p138, %p139
      %p141 = scmp.ne.s32.totalorder %s130, %s133
      %p142 = scmp.eq.s32.totalorder %s22, 3
      %p143 = por %p141, %p142
      %p144 = scmp.ne.s32.totalorder %s133, %s134
      %p145 = scmp.eq.s32.totalorder %s22, 0
      %p146 = por %p144, %p145
      %p147 = scmp.ne.s32.totalorder %s133, %s134
      %p148 = scmp.eq.s32.totalorder %s23, 3
      %p149 = por %p147, %p148
      %p151 = scmp.ne.s32.totalorder %s134, %s150
      %p152 = scmp.eq.s32.totalorder %s23, 0
      %p153 = por %p151, %p152
      %s154 = ssub.s32 %s24, %s36
      %s155 = ssub.s32 %s25, %s32
      %s156 = sor.u32 %s154, %s155
      %p157 = scmp.eq.s32.totalorder %s156, 0
      %s159 = sadd.s32 %s158, 1
      %s160 = scalar_select %p157, %s158, %s159
      %p163 = pneg %p157
      %p164 = scmp.eq.s32.totalorder %s17, 3
      %p165 = por %p163, %p164
      %p166 = scmp.ne.s32.totalorder %s158, %s161
      %p167 = scmp.eq.s32.totalorder %s17, 0
      %p168 = por %p166, %p167
      %p169 = scmp.ne.s32.totalorder %s158, %s161
      %p170 = scmp.eq.s32.totalorder %s22, 3
      %p171 = por %p169, %p170
      %p172 = scmp.ne.s32.totalorder %s161, %s162
      %p173 = scmp.eq.s32.totalorder %s22, 0
      %p174 = por %p172, %p173
      %p175 = scmp.ne.s32.totalorder %s161, %s162
      %p176 = scmp.eq.s32.totalorder %s23, 3
      %p177 = por %p175, %p176
      %p179 = scmp.ne.s32.totalorder %s162, %s178
      %p180 = scmp.eq.s32.totalorder %s23, 0
      %p181 = por %p179, %p180
      %p182 = scmp.le.s32.totalorder 1, %s17
      %p183 = scmp.lt.s32.totalorder %s17, 5
      %p184 = pnand %p182, %p183
      %p185 = pneg %p184
      // Predicated region
      $region9: #{tpu_custom_call.1} parent=5 // pred_check
        _
      $region10: #{tpu_custom_call.1} parent=5 // pred_check_branch
        %187 = sbr.rel (%p184) target = $region12
      $region11: #{tpu_custom_call.1} parent=5 // pred_region
        %s188 = ssub.s32 %s17, 1
        // Predicated region
        $region13: #{tpu_custom_call.1} parent=11 // pred_check
          %p189 = pneg %p78
        $region14: #{tpu_custom_call.1} parent=11 // pred_check_branch
          %191 = sbr.rel (%p189) target = $region16
        $region15: #{tpu_custom_call.1} parent=11 // pred_region
          _
        $region16: #{tpu_custom_call.1} parent=11 // pred_fallthru
          _
        // Predicated region
        $region17: #{tpu_custom_call.1} parent=11 // pred_check
          %p192 = pneg %p99
        $region18: #{tpu_custom_call.1} parent=11 // pred_check_branch
          %194 = sbr.rel (%p192) target = $region20
        $region19: #{tpu_custom_call.1} parent=11 // pred_region
          _
        $region20: #{tpu_custom_call.1} parent=11 // pred_fallthru
          _
        // Predicated region
        $region21: #{tpu_custom_call.1} parent=11 // pred_check
          %p195 = pneg %p120
        $region22: #{tpu_custom_call.1} parent=11 // pred_check_branch
          %197 = sbr.rel (%p195) target = $region24
        $region23: #{tpu_custom_call.1} parent=11 // pred_region
          _
        $region24: #{tpu_custom_call.1} parent=11 // pred_fallthru
          _
      $region12: #{tpu_custom_call.1} parent=5 // pred_fallthru
        _
      %p198 = scmp.lt.s32.totalorder %s17, 4
      // Predicated region
      $region25: #{tpu_custom_call.1} parent=5 // pred_check
        %p199 = pneg %p198
      $region26: #{tpu_custom_call.1} parent=5 // pred_check_branch
        %201 = sbr.rel (%p199) target = $region28
      $region27: #{tpu_custom_call.1} parent=5 // pred_region
        // Predicated region
        $region29: #{tpu_custom_call.1} parent=27 // pred_check
          %p202 = pneg %p51
        $region30: #{tpu_custom_call.1} parent=27 // pred_check_branch
          %204 = sbr.rel (%p202) target = $region32
        $region31: #{tpu_custom_call.1} parent=27 // pred_region
          %s205 = sand.u32 %s41, 1
          %s206 = scalar_lea.sflag [#allocation3], %s205
          %s207 = sand.u32 %s41, 1
          %s208 = smul.addr %s207, 64
          %s209 = scalar_lea.vmem [#allocation2], %s208
          %s211 = ssub.s32 1024, 1024
          %212 = vsyncadd %s206, %s211
          %s213 = smul.addr %s24, 16
          %s214 = sadd.s32 %s25, %s213
          %s215 = smul.addr %s214, 128
          %s216 = scalar_lea.hbm %s0, %s215
          %s217 = sshll.u32 %s209, 4
          %s218 = int_to_ptr.vmem [resolvable:$true] %s217
          %223 = dma.hbm_to_vmem [thread:$0]  %s216, 1024, %s218, %s206, 256, 128, 8
        $region32: #{tpu_custom_call.1} parent=27 // pred_fallthru
          _
        // Predicated region
        $region33: #{tpu_custom_call.1} parent=27 // pred_check
          %p224 = pneg %p140
        $region34: #{tpu_custom_call.1} parent=27 // pred_check_branch
          %226 = sbr.rel (%p224) target = $region36
        $region35: #{tpu_custom_call.1} parent=27 // pred_region
          %p227 = scmp.lt.s32.totalorder %s24, 1
          %s228 = scalar_select %p227, %s24, 1
          %s229 = smul.addr %s228, 8
          %s230 = smul.addr %s229, 8
          %s231 = scalar_lea.vmem %s4, %s230
        $region36: #{tpu_custom_call.1} parent=27 // pred_fallthru
          _
      $region28: #{tpu_custom_call.1} parent=5 // pred_fallthru
        _
      %p232 = scmp.le.s32.totalorder 1, %s17
      %p233 = scmp.lt.s32.totalorder %s17, 5
      %p234 = pnand %p232, %p233
      %p235 = pneg %p234
      // Predicated region
      $region37: #{tpu_custom_call.1} parent=5 // pred_check
        _
      $region38: #{tpu_custom_call.1} parent=5 // pred_check_branch
        %237 = sbr.rel (%p234) target = $region40
      $region39: #{tpu_custom_call.1} parent=5 // pred_region
        %s238 = ssub.s32 %s17, 1
        %s239 = sand.u32 %s44, 1
        %s240 = scalar_lea.sflag [#allocation3], %s239
        %s241 = sand.u32 %s44, 1
        %s242 = smul.addr %s241, 64
        %s243 = scalar_lea.vmem [#allocation2], %s242
        // Predicated region
        $region41: #{tpu_custom_call.1} parent=39 // pred_check
          %p244 = pneg %p57
        $region42: #{tpu_custom_call.1} parent=39 // pred_check_branch
          %246 = sbr.rel (%p244) target = $region44
        $region43: #{tpu_custom_call.1} parent=39 // pred_region
          %247 = dma.done %s240, 1024
        $region44: #{tpu_custom_call.1} parent=39 // pred_fallthru
          _
        %s248 = sand.u32 %s44, 1
        %s249 = scalar_lea.sflag [#allocation3], %s248
        %s250 = sand.u32 %s44, 1
        %s251 = smul.addr %s250, 64
        %s252 = scalar_lea.vmem [#allocation2], %s251
        %p253 = pneg %p57
        %p254 = pneg %p54
        %p255 = pneg %p78
        %p256 = pneg %p75
        %p257 = pneg %p99
        %p258 = pneg %p96
        %p259 = pneg %p120
        %p260 = pneg %p117
        %p261 = scmp.lt.s32.totalorder %s26, 1
        %s262 = scalar_select %p261, %s26, 1
        %s263 = smul.addr %s262, 8
        %s264 = smul.addr %s263, 8
        %s265 = scalar_lea.vmem %s4, %s264
        %p266 = pneg %p146
        %p267 = pneg %p143
        %p268 = pneg %p174
        %p269 = pneg %p171
        %s270 = sand.u32 %s161, 1
        %s271 = scalar_lea.sflag [#allocation4], %s270
        %s272 = sand.u32 %s161, 1
        %s273 = smul.addr %s272, 32
        %s274 = scalar_lea.vmem [#allocation5], %s273
        %p275 = scmp.lt.s32.totalorder %s26, 1
        %s276 = scalar_select %p275, %s26, 1
        %s277 = smul.addr %s276, 8
        %s278 = smul.addr %s277, 8
        %s279 = scalar_lea.vmem %s4, %s278
        %v281 = vld [vmem:[%s243] sm:$0xff]
        %v282 = vld [vmem:[%s243 + $0x8] sm:$0xff]
        %v283 = vld [vmem:[%s243 + $0x10] sm:$0xff]
        %v284 = vld [vmem:[%s243 + $0x18] sm:$0xff]
        %v285 = vld [vmem:[%s243 + $0x20] sm:$0xff]
        %v286 = vld [vmem:[%s243 + $0x28] sm:$0xff]
        %v287 = vld [vmem:[%s243 + $0x30] sm:$0xff]
        %v288 = vld [vmem:[%s243 + $0x38] sm:$0xff]
        %v289 = vpack.c.bf16 %v282, %v281
        %v290 = vpack.c.bf16 %v284, %v283
        %v291 = vpack.c.bf16 %v286, %v285
        %v292 = vpack.c.bf16 %v288, %v287
        %v293 = vld [vmem:[%s1] sm:$0xf]
        %v294 = vld [vmem:[%s1 + $0x4] sm:$0xf]
        %v295 = vld [vmem:[%s2] sm:$0xff]
        %v296 = vld [vmem:[%s2 + $0x8] sm:$0xff]
        %298 = vset.pattern.permute.xlu0 0
        %299 = vperm.xlu0 %298, %v295
        %v300 = vpop.permute.xlu0 %299
        %303 = vset.pattern.permute.xlu0 0
        %304 = vperm.xlu0 %303, %v296
        %v305 = vpop.permute.xlu0 %304
        %v309 = vunpack.c.l.b16 %v293
        %v310 = vunpack.c.l.b16 %v294
        %v311 = vpack.c.b16 %v310, %v309
        %vm312 = vcmask 523264
        %v314 = vsel %vm312, %v311, 0
        %316 = vmatprep.subr.bf16.mxu0 0
        %317 = vmatpush1.bf16.msra.mxu0 %v289
        %318 = vmatprep.subr.bf16.mxu0 0
        %319 = vmatpush1.bf16.msra.mxu0 %v290
        %320 = vmatprep.subr.bf16.mxu0 0
        %321 = vmatpush1.bf16.msra.mxu0 %v291
        %322 = vmatprep.subr.bf16.mxu0 0
        %323 = vmatpush1.bf16.msra.mxu0 %v292
        %324 = vmatprep.subr.bf16.mxu0 0
        %325 = vmatpush1.bf16.msra.mxu0 0
        %326 = vmatprep.subr.bf16.mxu0 0
        %327 = vmatpush1.bf16.msra.mxu0 0
        %328 = vmatprep.subr.bf16.mxu0 0
        %329 = vmatpush1.bf16.msra.mxu0 0
        %330 = vmatprep.subr.bf16.mxu0 0
        %331 = vmatpush1.bf16.msra.mxu0 0
        %332 = vmatprep.subr.bf16.mxu0 0
        %333 = vmatpush1.bf16.msra.mxu0 0
        %334 = vmatprep.subr.bf16.mxu0 0
        %335 = vmatpush1.bf16.msra.mxu0 0
        %336 = vmatprep.subr.bf16.mxu0 0
        %337 = vmatpush1.bf16.msra.mxu0 0
        %338 = vmatprep.subr.bf16.mxu0 0
        %339 = vmatpush1.bf16.msra.mxu0 0
        %340 = vmatprep.subr.bf16.mxu0 0
        %341 = vmatpush1.bf16.msra.mxu0 0
        %342 = vmatprep.subr.bf16.mxu0 0
        %343 = vmatpush1.bf16.msra.mxu0 0
        %344 = vmatprep.subr.bf16.mxu0 0
        %345 = vmatpush1.bf16.msra.mxu0 0
        %346 = vmatprep.subr.bf16.mxu0 0
        %347 = vmatpush1.bf16.msra.mxu0 0
        %348 = vmatprep.mubr.bf16.mxu0 0
        %349 = vmatmul.mubr.bf16.gmra.mrb[0].mxu0 %v314
        %v350 = vpop.f32.mrb[0].mxu0
        %v351 = vadd.f32 %v300, %v350
        %v352 = vpop.f32.mrb[0].mxu0
        %v353 = vpop.f32.mrb[0].mxu0
        %v354 = vadd.f32 %v305, %v353
        %v355 = vpop.f32.mrb[0].mxu0
        %356 = vdwg.mxu0
        %v357 = vmax.f32 %v351, 0.0
        %v358 = vmax.f32 %v354, 0.0
        %v359 = vld [vmem:[%s3] sm:$0xf]
        %v360 = vld [vmem:[%s3 + $0x4] sm:$0xf]
        %v361 = vld [vmem:[%s3 + $0x8] sm:$0xf]
        %v362 = vld [vmem:[%s3 + $0xc] sm:$0xf]
        %v363 = vld [vmem:[%s3 + $0x10] sm:$0xf]
        %v364 = vld [vmem:[%s3 + $0x14] sm:$0xf]
        %v365 = vld [vmem:[%s3 + $0x18] sm:$0xf]
        %v366 = vld [vmem:[%s3 + $0x1c] sm:$0xf]
        %v367 = vpack.c.bf16 %v358, %v357
        %v368 = vld [vmem:[%s279] sm:$0xff]
        %v369 = vld [vmem:[%s279 + $0x8] sm:$0xff]
        %v370 = vld [vmem:[%s279 + $0x10] sm:$0xff]
        %v371 = vld [vmem:[%s279 + $0x18] sm:$0xff]
        %v372 = vld [vmem:[%s279 + $0x20] sm:$0xff]
        %v373 = vld [vmem:[%s279 + $0x28] sm:$0xff]
        %v374 = vld [vmem:[%s279 + $0x30] sm:$0xff]
        %v375 = vld [vmem:[%s279 + $0x38] sm:$0xff]
        %377 = vset.pattern.permute.xlu0 0
        %378 = vperm.xlu0 %377, %v368
        %v379 = vpop.permute.xlu0 %378
        %382 = vset.pattern.permute.xlu0 0
        %383 = vperm.xlu0 %382, %v369
        %v384 = vpop.permute.xlu0 %383
        %387 = vset.pattern.permute.xlu0 0
        %388 = vperm.xlu0 %387, %v370
        %v389 = vpop.permute.xlu0 %388
        %392 = vset.pattern.permute.xlu0 0
        %393 = vperm.xlu0 %392, %v371
        %v394 = vpop.permute.xlu0 %393
        %397 = vset.pattern.permute.xlu0 0
        %398 = vperm.xlu0 %397, %v372
        %v399 = vpop.permute.xlu0 %398
        %402 = vset.pattern.permute.xlu0 0
        %403 = vperm.xlu0 %402, %v373
        %v404 = vpop.permute.xlu0 %403
        %407 = vset.pattern.permute.xlu0 0
        %408 = vperm.xlu0 %407, %v374
        %v409 = vpop.permute.xlu0 %408
        %412 = vset.pattern.permute.xlu0 0
        %413 = vperm.xlu0 %412, %v375
        %v414 = vpop.permute.xlu0 %413
        %v424 = vunpack.c.l.b16 %v359
        %v425 = vunpack.c.l.b16 %v360
        %v426 = vunpack.c.l.b16 %v361
        %v427 = vunpack.c.l.b16 %v362
        %v428 = vunpack.c.l.b16 %v363
        %v429 = vunpack.c.l.b16 %v364
        %v430 = vunpack.c.l.b16 %v365
        %v431 = vunpack.c.l.b16 %v366
        %v432 = vpack.c.b16 %v425, %v424
        %v433 = vpack.c.b16 %v427, %v426
        %v434 = vpack.c.b16 %v429, %v428
        %v435 = vpack.c.b16 %v431, %v430
        %vm436 = vcmask 130048
        %v438 = vsel %vm436, %v432, 0
        %v441 = vsel %vm436, %v433, 0
        %v444 = vsel %vm436, %v434, 0
        %v447 = vsel %vm436, %v435, 0
        %449 = vmatprep.subr.bf16.mxu0 0
        %450 = vmatpush1.bf16.msra.mxu0 %v367
        %451 = vmatprep.subr.bf16.mxu0 0
        %452 = vmatpush1.bf16.msra.mxu0 0
        %453 = vmatprep.subr.bf16.mxu0 0
        %454 = vmatpush1.bf16.msra.mxu0 0
        %455 = vmatprep.subr.bf16.mxu0 0
        %456 = vmatpush1.bf16.msra.mxu0 0
        %457 = vmatprep.subr.bf16.mxu0 0
        %458 = vmatpush1.bf16.msra.mxu0 0
        %459 = vmatprep.subr.bf16.mxu0 0
        %460 = vmatpush1.bf16.msra.mxu0 0
        %461 = vmatprep.subr.bf16.mxu0 0
        %462 = vmatpush1.bf16.msra.mxu0 0
        %463 = vmatprep.subr.bf16.mxu0 0
        %464 = vmatpush1.bf16.msra.mxu0 0
        %465 = vmatprep.subr.bf16.mxu0 0
        %466 = vmatpush1.bf16.msra.mxu0 0
        %467 = vmatprep.subr.bf16.mxu0 0
        %468 = vmatpush1.bf16.msra.mxu0 0
        %469 = vmatprep.subr.bf16.mxu0 0
        %470 = vmatpush1.bf16.msra.mxu0 0
        %471 = vmatprep.subr.bf16.mxu0 0
        %472 = vmatpush1.bf16.msra.mxu0 0
        %473 = vmatprep.subr.bf16.mxu0 0
        %474 = vmatpush1.bf16.msra.mxu0 0
        %475 = vmatprep.subr.bf16.mxu0 0
        %476 = vmatpush1.bf16.msra.mxu0 0
        %477 = vmatprep.subr.bf16.mxu0 0
        %478 = vmatpush1.bf16.msra.mxu0 0
        %479 = vmatprep.subr.bf16.mxu0 0
        %480 = vmatpush1.bf16.msra.mxu0 0
        %481 = vmatprep.mubr.bf16.mxu0 0
        %482 = vmatmul.mubr.bf16.gmra.mrb[0].mxu0 %v438
        %v483 = vpop.f32.mrb[0].mxu0
        %v484 = vadd.f32 %v379, %v483
        %v485 = vpop.f32.mrb[0].mxu0
        %v486 = vpop.f32.mrb[0].mxu0
        %v487 = vadd.f32 %v384, %v486
        %v488 = vpop.f32.mrb[0].mxu0
        %489 = vmatprep.mubr.bf16.mxu0 0
        %490 = vmatmul.mubr.bf16.gmra.mrb[0].mxu0 %v441
        %v491 = vpop.f32.mrb[0].mxu0
        %v492 = vadd.f32 %v389, %v491
        %v493 = vpop.f32.mrb[0].mxu0
        %v494 = vpop.f32.mrb[0].mxu0
        %v495 = vadd.f32 %v394, %v494
        %v496 = vpop.f32.mrb[0].mxu0
        %497 = vmatprep.mubr.bf16.mxu0 0
        %498 = vmatmul.mubr.bf16.gmra.mrb[0].mxu0 %v444
        %v499 = vpop.f32.mrb[0].mxu0
        %v500 = vadd.f32 %v399, %v499
        %v501 = vpop.f32.mrb[0].mxu0
        %v502 = vpop.f32.mrb[0].mxu0
        %v503 = vadd.f32 %v404, %v502
        %v504 = vpop.f32.mrb[0].mxu0
        %505 = vmatprep.mubr.bf16.mxu0 0
        %506 = vmatmul.mubr.bf16.gmra.mrb[0].mxu0 %v447
        %v507 = vpop.f32.mrb[0].mxu0
        %v508 = vadd.f32 %v409, %v507
        %v509 = vpop.f32.mrb[0].mxu0
        %v510 = vpop.f32.mrb[0].mxu0
        %v511 = vadd.f32 %v414, %v510
        %v512 = vpop.f32.mrb[0].mxu0
        %513 = vdwg.mxu0
        %v514 = vmul.f32 %v484, 0.5
        %v515 = vmul.f32 %v487, 0.5
        %v516 = vmul.f32 %v492, 0.5
        %v517 = vmul.f32 %v495, 0.5
        %v518 = vmul.f32 %v500, 0.5
        %v519 = vmul.f32 %v503, 0.5
        %v520 = vmul.f32 %v508, 0.5
        %v521 = vmul.f32 %v511, 0.5
        %v522 = vtanh.pop %v514
        %v523 = vtanh.pop %v515
        %v524 = vtanh.pop %v516
        %v525 = vtanh.pop %v517
        %v526 = vtanh.pop %v518
        %v527 = vtanh.pop %v519
        %v528 = vtanh.pop %v520
        %v529 = vtanh.pop %v521
        %v530 = vmul.f32 %v522, 0.5
        %v531 = vmul.f32 %v523, 0.5
        %v532 = vmul.f32 %v524, 0.5
        %v533 = vmul.f32 %v525, 0.5
        %v534 = vmul.f32 %v526, 0.5
        %v535 = vmul.f32 %v527, 0.5
        %v536 = vmul.f32 %v528, 0.5
        %v537 = vmul.f32 %v529, 0.5
        %v538 = vadd.f32 %v530, 0.5
        %v539 = vadd.f32 %v531, 0.5
        %v540 = vadd.f32 %v532, 0.5
        %v541 = vadd.f32 %v533, 0.5
        %v542 = vadd.f32 %v534, 0.5
        %v543 = vadd.f32 %v535, 0.5
        %v544 = vadd.f32 %v536, 0.5
        %v545 = vadd.f32 %v537, 0.5
        %v546 = vpack.c.bf16 %v539, %v538
        %v547 = vpack.c.bf16 %v541, %v540
        %v548 = vpack.c.bf16 %v543, %v542
        %v549 = vpack.c.bf16 %v545, %v544
        %v554 = vunpack.c.l.b16 %v546
        %v555 = vunpack.c.h.b16 %v546
        %v556 = vunpack.c.l.b16 %v547
        %v557 = vunpack.c.h.b16 %v547
        %v558 = vunpack.c.l.b16 %v548
        %v559 = vunpack.c.h.b16 %v548
        %v560 = vunpack.c.l.b16 %v549
        %v561 = vunpack.c.h.b16 %v549
        %v562 = vpack.c.b16 %v554, %v554
        %v563 = vpack.c.b16 %v555, %v555
        %v564 = vpack.c.b16 %v556, %v556
        %v565 = vpack.c.b16 %v557, %v557
        %v566 = vpack.c.b16 %v558, %v558
        %v567 = vpack.c.b16 %v559, %v559
        %v568 = vpack.c.b16 %v560, %v560
        %v569 = vpack.c.b16 %v561, %v561
        %578 = vst [vmem:[%s274] sm:$0xf] %v562
        %579 = vst [vmem:[%s274 + $0x4] sm:$0xf] %v563
        %580 = vst [vmem:[%s274 + $0x8] sm:$0xf] %v564
        %581 = vst [vmem:[%s274 + $0xc] sm:$0xf] %v565
        %582 = vst [vmem:[%s274 + $0x10] sm:$0xf] %v566
        %583 = vst [vmem:[%s274 + $0x14] sm:$0xf] %v567
        %584 = vst [vmem:[%s274 + $0x18] sm:$0xf] %v568
        %585 = vst [vmem:[%s274 + $0x1c] sm:$0xf] %v569
        %s586 = sand.u32 %s161, 1
        %s587 = scalar_lea.sflag [#allocation4], %s586
        %s588 = sand.u32 %s161, 1
        %s589 = smul.addr %s588, 32
        %s590 = scalar_lea.vmem [#allocation5], %s589
        // Predicated region
        $region45: #{tpu_custom_call.1} parent=39 // pred_check
          %p591 = pneg %p171
        $region46: #{tpu_custom_call.1} parent=39 // pred_check_branch
          %593 = sbr.rel (%p591) target = $region48
        $region47: #{tpu_custom_call.1} parent=39 // pred_region
          %s595 = ssub.s32 512, 512
          %596 = vsyncadd %s587, %s595
          %s597 = smul.addr %s26, 16
          %s598 = sadd.s32 %s27, %s597
          %s599 = smul.addr %s598, 64
          %s600 = scalar_lea.hbm %s5, %s599
          %s601 = sshll.u32 %s590, 4
          %s602 = int_to_ptr.vmem [resolvable:$true] %s601
          %607 = dma.vmem_to_hbm [thread:$0]  %s602, 512, %s600, %s587, 64, 128, 4
        $region48: #{tpu_custom_call.1} parent=39 // pred_fallthru
          _
      $region40: #{tpu_custom_call.1} parent=5 // pred_fallthru
        _
      %p608 = scmp.le.s32.totalorder 2, %s17
      // Predicated region
      $region49: #{tpu_custom_call.1} parent=5 // pred_check
        %p609 = pneg %p608
      $region50: #{tpu_custom_call.1} parent=5 // pred_check_branch
        %611 = sbr.rel (%p609) target = $region52
      $region51: #{tpu_custom_call.1} parent=5 // pred_region
        %s612 = ssub.s32 %s17, 2
        // Predicated region
        $region53: #{tpu_custom_call.1} parent=51 // pred_check
          %p613 = pneg %p177
        $region54: #{tpu_custom_call.1} parent=51 // pred_check_branch
          %615 = sbr.rel (%p613) target = $region56
        $region55: #{tpu_custom_call.1} parent=51 // pred_region
          %s616 = sand.u32 %s162, 1
          %s617 = scalar_lea.sflag [#allocation4], %s616
          %s618 = sand.u32 %s162, 1
          %s619 = smul.addr %s618, 32
          %s620 = scalar_lea.vmem [#allocation5], %s619
          %621 = dma.done %s617, 512
        $region56: #{tpu_custom_call.1} parent=51 // pred_fallthru
          _
      $region52: #{tpu_custom_call.1} parent=5 // pred_fallthru
        _
    $region6: #{tpu_custom_call.1} parent=1 // loop_footer
      %s21 = sadd.s32 1, %s17
    $region7: #{tpu_custom_call.1} parent=1 // loop_footer_branch
      %16 = sbr.rel target = $region3
    $region8: #{tpu_custom_call.1} parent=1 // loop_exit
      _
    %622 = vsyncpa [#allocation3], 1
    %s623 = scalar_lea.sflag [#allocation3], 1
    %624 = vsyncpa %s623, 1
    %625 = vsyncpa [#allocation4], 1
    %s626 = scalar_lea.sflag [#allocation4], 1
    %627 = vsyncpa %s626, 1

</llo_original>
